<compile_context>
chip_gen: v5e
topology: v5e:2x2
jax: 0.10.0
libtpu: 0.0.40
codegen_flags: <defaults>
</compile_context>

<pallas_src>
import functools

import jax
import jax.numpy as jnp
from jax.experimental import pallas as pl
from jax.experimental.pallas import tpu as pltpu

_MIB = 1024 * 1024


def _round_down(x, m):
    return (x // m) * m


def _vmem_capacity_bytes():
    """Per-core VMEM capacity; conservative fallback (v7x's 64 MiB) if unknown."""
    try:
        return int(pltpu.get_tpu_info().vmem_capacity_bytes)
    except Exception:
        return 64 * _MIB


def em_loss_ref(output):
    """Pure-JAX reference matching the PyTorch module (also the vocab-scale fallback)."""
    x = output.astype(jnp.float32)
    logp = jax.nn.log_softmax(x, axis=1)
    p = jnp.exp(logp)
    return jnp.mean(-jnp.sum(p * logp, axis=1), axis=0)


def _em_kernel_rows(x_ref, o_ref, acc_ref, *, n_valid_rows, tile_rows,
                    steps_per_outer, ragged, inv_n):
    """Generic path: (tile_rows, C) blocks, per-row entropy along the lane axis."""
    o = pl.program_id(0)
    i = pl.program_id(1)

    @pl.when(i == 0)
    def _():
        acc_ref[...] = jnp.zeros_like(acc_ref)

    x = x_ref[...].astype(jnp.float32)                       # (T, C)
    m = jnp.max(x, axis=1, keepdims=True)                    # (T, 1)  XLU
    z = x - m                                                # (T, C)  VPU
    e = jnp.exp(z)                                           # (T, C)  EUP
    s = jnp.sum(e, axis=1, keepdims=True)                    # (T, 1)  XLU
    ez = jnp.sum(e * z, axis=1, keepdims=True)               # (T, 1)  VPU+XLU
    ent = jnp.log(s) - ez / s                                # (T, 1)  exact divide

    if ragged:  # only emitted when some tile is partial / out of range
        r0 = (o * steps_per_outer + i) * tile_rows
        rid = r0 + jax.lax.broadcasted_iota(jnp.int32, ent.shape, 0)
        ent = jnp.where(rid < n_valid_rows, ent, 0.0)

    # Per-sublane partial accumulate: pure vreg adds, no per-step cross-sublane
    # reduction and no loop-carried scalar dependency.
    acc_ref[...] += ent.reshape(tile_rows // 8, 8, 1).sum(axis=0)

    @pl.when(i == steps_per_outer - 1)
    def _():
        total = jnp.sum(acc_ref[...]) * inv_n
        o_ref[...] = jnp.full(o_ref.shape, total, jnp.float32)


def _em_kernel_packed(x_ref, seg_ref, o_ref, acc_ref, *, n_valid_rows, tile_rows,
                      steps_per_outer, pack, ragged, inv_n):
    """Lane-dense path for C = 128 // pack classes: `pack` rows per 128-lane row."""
    o = pl.program_id(0)
    i = pl.program_id(1)
    seg_len = 128 // pack                                    # = C

    @pl.when(i == 0)
    def _():
        acc_ref[...] = jnp.zeros_like(acc_ref)

    x = x_ref[...].astype(jnp.float32)                       # (T, 128) lane-dense
    lane = jax.lax.broadcasted_iota(jnp.int32, x.shape, 1)

    # Exact per-segment (per original row) max, broadcast back onto its lanes.
    m = jnp.zeros_like(x)
    for g in range(pack):                                    # pack <= 4, unrolled
        in_seg = jnp.logical_and(lane >= g * seg_len, lane < (g + 1) * seg_len)
        mg = jnp.max(jnp.where(in_seg, x, -jnp.inf), axis=1, keepdims=True)
        m = jnp.where(in_seg, mg, m)

    z = x - m                                                # (T, 128) VPU dense
    e = jnp.exp(z)                                           # (T, 128) EUP dense
    seg = seg_ref[...]                                       # (128, pack) 0/1 matrix
    s = jnp.dot(e, seg, preferred_element_type=jnp.float32,
                precision=jax.lax.Precision.HIGHEST)         # (T, pack) MXU
    ez = jnp.dot(e * z, seg, preferred_element_type=jnp.float32,
                 precision=jax.lax.Precision.HIGHEST)        # (T, pack) MXU
    ent = jnp.log(s) - ez / s                                # (T, pack) = H per row

    if ragged:
        r0 = (o * steps_per_outer + i) * tile_rows
        rid = r0 + jax.lax.broadcasted_iota(jnp.int32, ent.shape, 0)
        ent = jnp.where(rid < n_valid_rows, ent, 0.0)

    acc_ref[...] += ent.reshape(tile_rows // 8, 8, pack).sum(axis=0)

    @pl.when(i == steps_per_outer - 1)
    def _():
        total = jnp.sum(acc_ref[...]) * inv_n
        o_ref[...] = jnp.full(o_ref.shape, total, jnp.float32)


def em_loss(output):
    """mean_b(-sum_c softmax(x) * log_softmax(x)) for a (B, C) logits tensor."""
    if output.ndim != 2:
        raise ValueError(f"EM expects (batch, classes) logits, got {output.shape}")
    B, C = output.shape
    itemsize = jnp.dtype(output.dtype).itemsize
    sub = max(8, 32 // itemsize)            # sublane multiple for the input dtype

    # Generation-aware VMEM budget (v5e/v6e: 128 MiB -> 80 MiB scoped; v7x: 64 -> 40).
    cap = _vmem_capacity_bytes()
    vmem_limit = int(min(cap * 5 // 8, 96 * _MIB))
    budget = (vmem_limit * 7) // 10         # for input double-buffer + f32 temps

    # Lane-dense packing for narrow class dims.
    pack = 128 // C if C in (32, 64) else 1
    packed = pack > 1 and B % pack == 0
    # TODO(synk): extend lane packing to C in {8, 16} (needs a log-step segmented
    # max) and to B % pack != 0 without an extra HBM pad pass.

    if packed:
        rows, lastdim = B // pack, 128
        x2 = output.reshape(rows, 128)      # free: contiguous row-major reshape
    else:
        rows, lastdim = B, C
        x2 = output

    # Per-row VMEM cost: double-buffered input + ~8 tile-sized f32 temporaries.
    per_row = 2 * lastdim * itemsize + 8 * lastdim * 4
    if per_row * sub > budget:
        # Class dim too wide for even a minimal row tile.
        # TODO(synk): class-axis (online-softmax) tiling for vocab-scale C.
        return em_loss_ref(output)

    n_valid = rows
    if rows < sub:                          # tiny inputs: keep the block <= array
        x2 = jnp.pad(x2, ((0, sub - rows), (0, 0)))
        rows = sub

    tile_rows = max(sub, _round_down(min(budget // per_row, rows), sub))
    n_tiles = pl.cdiv(rows, tile_rows)

    # Leading core-parallel axis: megacore parts (v7x: 2 TCs) split the batch
    # reduction; single-TC parts just run two sequential chunks (free).
    n_outer = 2 if n_tiles >= 2 else 1
    spo = pl.cdiv(n_tiles, n_outer)
    ragged = (n_outer * spo * tile_rows) != n_valid
    inv_n = 1.0 / float(B)

    def x_index_map(o, i):
        # Clamp fully out-of-range steps (ceil-div / outer split); their
        # contribution is masked inside the kernel.
        return (jnp.minimum(o * spo + i, n_tiles - 1), 0)

    if packed:
        seg_id = jnp.arange(128, dtype=jnp.int32) // C
        seg_mat = (seg_id[:, None] ==
                   jnp.arange(pack, dtype=jnp.int32)[None, :]).astype(jnp.float32)
        kernel = functools.partial(
            _em_kernel_packed, n_valid_rows=n_valid, tile_rows=tile_rows,
            steps_per_outer=spo, pack=pack, ragged=ragged, inv_n=inv_n)
        in_specs = [pl.BlockSpec((tile_rows, 128), x_index_map),
                    pl.BlockSpec((128, pack), lambda o, i: (0, 0))]
        scratch = [pltpu.VMEM((8, pack), jnp.float32)]
        args = (x2, seg_mat)
    else:
        kernel = functools.partial(
            _em_kernel_rows, n_valid_rows=n_valid, tile_rows=tile_rows,
            steps_per_outer=spo, ragged=ragged, inv_n=inv_n)
        in_specs = [pl.BlockSpec((tile_rows, C), x_index_map)]
        scratch = [pltpu.VMEM((8, 1), jnp.float32)]
        args = (x2,)

    out = pl.pallas_call(
        kernel,
        # One lane-dense (8, 128) partial-sum block per outer chunk.
        out_shape=jax.ShapeDtypeStruct((n_outer * 8, 128), jnp.float32),
        grid_spec=pltpu.PrefetchScalarGridSpec(
            num_scalar_prefetch=0,
            grid=(n_outer, spo),
            in_specs=in_specs,
            out_specs=pl.BlockSpec((8, 128), lambda o, i: (o, 0)),
            scratch_shapes=scratch,
        ),
        compiler_params=pltpu.CompilerParams(
            dimension_semantics=("parallel", "arbitrary"),
            vmem_limit_bytes=vmem_limit,
        ),
        cost_estimate=pl.CostEstimate(
            flops=6 * B * C,
            transcendentals=B * C + 2 * B,
            bytes_accessed=B * C * itemsize + n_outer * 8 * 128 * 4,
        ),
    )(*args)
    # Each outer chunk wrote its (already /B) partial broadcast over its block.
    return jnp.sum(out[0::8, 0])


if __name__ == "__main__":
    key = jax.random.PRNGKey(0)
    k1, k2, k3 = jax.random.split(key, 3)

    # 1) Narrow classes (C=32) -> lane-packed path (4 rows per 128-lane vreg row).
    x1 = jax.random.normal(k1, (8, 32), dtype=jnp.float32)
    l1 = em_loss(x1)
    jax.block_until_ready(l1)
    r1 = em_loss_ref(x1)
    assert jnp.allclose(l1, r1, atol=5e-3, rtol=5e-3), (l1, r1)

    # 2) Ragged packed case: 20 rows -> 5 packed rows, padded + masked tile.
    x2 = jax.random.normal(k2, (20, 32), dtype=jnp.float32) * 4.0
    l2 = em_loss(x2)
    jax.block_until_ready(l2)
    r2 = em_loss_ref(x2)
    assert jnp.allclose(l2, r2, atol=5e-3, rtol=5e-3), (l2, r2)

    # 3) Generic row-tiled path (C does not divide 128), bf16 input, ragged batch.
    x3 = (jax.random.normal(k3, (24, 100), dtype=jnp.float32) * 3.0).astype(jnp.bfloat16)
    l3 = em_loss(x3)
    jax.block_until_ready(l3)
    r3 = em_loss_ref(x3)
    assert jnp.allclose(l3, r3, atol=5e-3, rtol=5e-3), (l3, r3)

    print("KERNEL_OK")
</pallas_src>

<mosaic_0001>
module attributes {stable_mosaic.version = 11 : i64} {
  func.func @_em_kernel_packed(%arg0: i32, %arg1: i32, %arg2: memref<8x128xf32, #tpu.memory_space<vmem>>, %arg3: memref<128x4xf32, #tpu.memory_space<vmem>>, %arg4: memref<8x128xf32, #tpu.memory_space<vmem>>, %arg5: memref<8x4xf32, #tpu.memory_space<vmem>>) attributes {dimension_semantics = [#tpu.dimension_semantics<parallel>, #tpu.dimension_semantics<arbitrary>], iteration_bounds = array<i64: 1, 1>, scalar_prefetch = 0 : i64, scratch_operands = 1 : i64, tpu.core_type = #tpu.core_type<tc>, window_params = [{transform_indices = @transform_0, window_bounds = array<i64: 8, 128>}, {pipeline_mode = #tpu.pipeline_mode<synchronous>, transform_indices = @transform_1, window_bounds = array<i64: 128, 4>}, {transform_indices = @transform_2, window_bounds = array<i64: 8, 128>}]} {
    %c0_i32 = arith.constant 0 : i32
    %0 = arith.cmpi eq, %arg1, %c0_i32 : i32
    %1 = arith.extui %0 : i1 to i32
    %c0_i32_0 = arith.constant 0 : i32
    %2 = arith.cmpi ne, %1, %c0_i32_0 : i32
    scf.if %2 {
      %cst_26 = arith.constant 0.000000e+00 : f32
      %81 = vector.broadcast %cst_26 : f32 to vector<8x4xf32>
      %c0_27 = arith.constant 0 : index
      %c0_28 = arith.constant 0 : index
      %82 = vector.load %arg5[%c0_27, %c0_28] : memref<8x4xf32, #tpu.memory_space<vmem>>, vector<8x4xf32>
      tpu.vector_store %arg5[%c0_27, %c0_28], %81 {strides = array<i32>} : memref<8x4xf32, #tpu.memory_space<vmem>>, vector<8x4xf32>,
    } else {
    }
    %c0 = arith.constant 0 : index
    %c0_1 = arith.constant 0 : index
    %3 = vector.load %arg2[%c0, %c0_1] : memref<8x128xf32, #tpu.memory_space<vmem>>, vector<8x128xf32>
    %4 = tpu.iota {dimensions = array<i32: 1>} : vector<8x128xi32>
    %cst = arith.constant 0.000000e+00 : f32
    %5 = vector.broadcast %cst : f32 to vector<8x128xf32>
    %c0_i32_2 = arith.constant 0 : i32
    %6 = vector.broadcast %c0_i32_2 : i32 to vector<8x128xi32>
    %7 = arith.cmpi sge, %4, %6 : vector<8x128xi32>
    %c32_i32 = arith.constant 32 : i32
    %8 = vector.broadcast %c32_i32 : i32 to vector<8x128xi32>
    %9 = arith.cmpi slt, %4, %8 : vector<8x128xi32>
    %10 = arith.andi %7, %9 : vector<8x128xi1>
    %cst_3 = arith.constant 0xFF800000 : f32
    %11 = vector.broadcast %cst_3 : f32 to vector<8x128xf32>
    %12 = arith.select %10, %3, %11 : vector<8x128xi1>, vector<8x128xf32>
    %cst_4 = arith.constant dense<0xFF800000> : vector<8xf32>
    %13 = vector.multi_reduction <maximumf>, %12, %cst_4 [1] : vector<8x128xf32> to vector<8xf32>
    %14 = vector.shape_cast %13 : vector<8xf32> to vector<8x1xf32>
    %15 = vector.shape_cast %14 : vector<8x1xf32> to vector<8x1xf32>
    %16 = vector.broadcast %15 : vector<8x1xf32> to vector<8x128xf32>
    %17 = arith.select %10, %16, %5 : vector<8x128xi1>, vector<8x128xf32>
    %c32_i32_5 = arith.constant 32 : i32
    %18 = vector.broadcast %c32_i32_5 : i32 to vector<8x128xi32>
    %19 = arith.cmpi sge, %4, %18 : vector<8x128xi32>
    %c64_i32 = arith.constant 64 : i32
    %20 = vector.broadcast %c64_i32 : i32 to vector<8x128xi32>
    %21 = arith.cmpi slt, %4, %20 : vector<8x128xi32>
    %22 = arith.andi %19, %21 : vector<8x128xi1>
    %cst_6 = arith.constant 0xFF800000 : f32
    %23 = vector.broadcast %cst_6 : f32 to vector<8x128xf32>
    %24 = arith.select %22, %3, %23 : vector<8x128xi1>, vector<8x128xf32>
    %cst_7 = arith.constant dense<0xFF800000> : vector<8xf32>
    %25 = vector.multi_reduction <maximumf>, %24, %cst_7 [1] : vector<8x128xf32> to vector<8xf32>
    %26 = vector.shape_cast %25 : vector<8xf32> to vector<8x1xf32>
    %27 = vector.shape_cast %26 : vector<8x1xf32> to vector<8x1xf32>
    %28 = vector.broadcast %27 : vector<8x1xf32> to vector<8x128xf32>
    %29 = arith.select %22, %28, %17 : vector<8x128xi1>, vector<8x128xf32>
    %c64_i32_8 = arith.constant 64 : i32
    %30 = vector.broadcast %c64_i32_8 : i32 to vector<8x128xi32>
    %31 = arith.cmpi sge, %4, %30 : vector<8x128xi32>
    %c96_i32 = arith.constant 96 : i32
    %32 = vector.broadcast %c96_i32 : i32 to vector<8x128xi32>
    %33 = arith.cmpi slt, %4, %32 : vector<8x128xi32>
    %34 = arith.andi %31, %33 : vector<8x128xi1>
    %cst_9 = arith.constant 0xFF800000 : f32
    %35 = vector.broadcast %cst_9 : f32 to vector<8x128xf32>
    %36 = arith.select %34, %3, %35 : vector<8x128xi1>, vector<8x128xf32>
    %cst_10 = arith.constant dense<0xFF800000> : vector<8xf32>
    %37 = vector.multi_reduction <maximumf>, %36, %cst_10 [1] : vector<8x128xf32> to vector<8xf32>
    %38 = vector.shape_cast %37 : vector<8xf32> to vector<8x1xf32>
    %39 = vector.shape_cast %38 : vector<8x1xf32> to vector<8x1xf32>
    %40 = vector.broadcast %39 : vector<8x1xf32> to vector<8x128xf32>
    %41 = arith.select %34, %40, %29 : vector<8x128xi1>, vector<8x128xf32>
    %c96_i32_11 = arith.constant 96 : i32
    %42 = vector.broadcast %c96_i32_11 : i32 to vector<8x128xi32>
    %43 = arith.cmpi sge, %4, %42 : vector<8x128xi32>
    %c128_i32 = arith.constant 128 : i32
    %44 = vector.broadcast %c128_i32 : i32 to vector<8x128xi32>
    %45 = arith.cmpi slt, %4, %44 : vector<8x128xi32>
    %46 = arith.andi %43, %45 : vector<8x128xi1>
    %cst_12 = arith.constant 0xFF800000 : f32
    %47 = vector.broadcast %cst_12 : f32 to vector<8x128xf32>
    %48 = arith.select %46, %3, %47 : vector<8x128xi1>, vector<8x128xf32>
    %cst_13 = arith.constant dense<0xFF800000> : vector<8xf32>
    %49 = vector.multi_reduction <maximumf>, %48, %cst_13 [1] : vector<8x128xf32> to vector<8xf32>
    %50 = vector.shape_cast %49 : vector<8xf32> to vector<8x1xf32>
    %51 = vector.shape_cast %50 : vector<8x1xf32> to vector<8x1xf32>
    %52 = vector.broadcast %51 : vector<8x1xf32> to vector<8x128xf32>
    %53 = arith.select %46, %52, %41 : vector<8x128xi1>, vector<8x128xf32>
    %54 = arith.subf %3, %53 : vector<8x128xf32>
    %55 = math.exp %54 : vector<8x128xf32>
    %c0_14 = arith.constant 0 : index
    %c0_15 = arith.constant 0 : index
    %56 = vector.load %arg3[%c0_14, %c0_15] : memref<128x4xf32, #tpu.memory_space<vmem>>, vector<128x4xf32>
    %cst_16 = arith.constant dense<0.000000e+00> : vector<8x4xf32>
    %57 = tpu.matmul %55, %56, %cst_16 {dimension_numbers = #tpu.dot_dimension_numbers<[1], [0], [0], [1], [0, 0, 1, 1], [], []>, precision = #tpu.contract_precision<fp32>} : vector<8x128xf32>, vector<128x4xf32>, vector<8x4xf32> -> vector<8x4xf32>
    %58 = arith.mulf %55, %54 : vector<8x128xf32>
    %cst_17 = arith.constant dense<0.000000e+00> : vector<8x4xf32>
    %59 = tpu.matmul %58, %56, %cst_17 {dimension_numbers = #tpu.dot_dimension_numbers<[1], [0], [0], [1], [0, 0, 1, 1], [], []>, precision = #tpu.contract_precision<fp32>} : vector<8x128xf32>, vector<128x4xf32>, vector<8x4xf32> -> vector<8x4xf32>
    %60 = math.log %57 : vector<8x4xf32>
    %61 = arith.divf %59, %57 : vector<8x4xf32>
    %62 = arith.subf %60, %61 : vector<8x4xf32>
    %c1_i32 = arith.constant 1 : i32
    %63 = arith.muli %arg0, %c1_i32 : i32
    %64 = arith.addi %63, %arg1 : i32
    %c8_i32 = arith.constant 8 : i32
    %65 = arith.muli %64, %c8_i32 : i32
    %66 = tpu.iota {dimensions = array<i32: 0>} : vector<8x4xi32>
    %67 = vector.broadcast %65 : i32 to vector<8x4xi32>
    %68 = arith.addi %67, %66 : vector<8x4xi32>
    %c2_i32 = arith.constant 2 : i32
    %69 = vector.broadcast %c2_i32 : i32 to vector<8x4xi32>
    %70 = arith.cmpi slt, %68, %69 : vector<8x4xi32>
    %cst_18 = arith.constant 0.000000e+00 : f32
    %71 = vector.broadcast %cst_18 : f32 to vector<8x4xf32>
    %72 = arith.select %70, %62, %71 : vector<8x4xi1>, vector<8x4xf32>
    %c0_19 = arith.constant 0 : index
    %c0_20 = arith.constant 0 : index
    %73 = vector.load %arg5[%c0_19, %c0_20] : memref<8x4xf32, #tpu.memory_space<vmem>>, vector<8x4xf32>
    %74 = vector.shape_cast %72 : vector<8x4xf32> to vector<1x8x4xf32>
    %cst_21 = arith.constant dense<0.000000e+00> : vector<8x4xf32>
    %75 = vector.multi_reduction <add>, %74, %cst_21 [0] : vector<1x8x4xf32> to vector<8x4xf32>
    %76 = arith.addf %73, %75 : vector<8x4xf32>
    %c0_22 = arith.constant 0 : index
    %c0_23 = arith.constant 0 : index
    %77 = vector.load %arg5[%c0_22, %c0_23] : memref<8x4xf32, #tpu.memory_space<vmem>>, vector<8x4xf32>
    tpu.vector_store %arg5[%c0_22, %c0_23], %76 {strides = array<i32>} : memref<8x4xf32, #tpu.memory_space<vmem>>, vector<8x4xf32>,
    %c0_i32_24 = arith.constant 0 : i32
    %78 = arith.cmpi eq, %arg1, %c0_i32_24 : i32
    %79 = arith.extui %78 : i1 to i32
    %c0_i32_25 = arith.constant 0 : i32
    %80 = arith.cmpi ne, %79, %c0_i32_25 : i32
    scf.if %80 {
      %c0_26 = arith.constant 0 : index
      %c0_27 = arith.constant 0 : index
      %81 = vector.load %arg5[%c0_26, %c0_27] : memref<8x4xf32, #tpu.memory_space<vmem>>, vector<8x4xf32>
      %82 = vector.shape_cast %81 : vector<8x4xf32> to vector<1x8x4xf32>
      %cst_28 = arith.constant dense<0.000000e+00> : vector<1xf32>
      %83 = vector.multi_reduction <add>, %82, %cst_28 [1, 2] : vector<1x8x4xf32> to vector<1xf32>
      %84 = vector.shape_cast %83 : vector<1xf32> to vector<1x1x1xf32>
      %85 = vector.extract %84[0, 0, 0] : f32 from vector<1x1x1xf32>
      %cst_29 = arith.constant 1.250000e-01 : f32
      %86 = arith.mulf %85, %cst_29 : f32
      %87 = vector.broadcast %86 : f32 to vector<8x128xf32>
      %c0_30 = arith.constant 0 : index
      %c0_31 = arith.constant 0 : index
      %88 = vector.load %arg4[%c0_30, %c0_31] : memref<8x128xf32, #tpu.memory_space<vmem>>, vector<8x128xf32>
      tpu.vector_store %arg4[%c0_30, %c0_31], %87 {strides = array<i32>} : memref<8x128xf32, #tpu.memory_space<vmem>>, vector<8x128xf32>,
    } else {
    }
    return
  }
  func.func @transform_0(%arg0: i32, %arg1: i32) -> (i32, i32) {
    %c1_i32 = arith.constant 1 : i32
    %0 = arith.muli %arg0, %c1_i32 : i32
    %1 = arith.addi %0, %arg1 : i32
    %c0_i32 = arith.constant 0 : i32
    %2 = arith.minsi %1, %c0_i32 : i32
    %c0_i32_0 = arith.constant 0 : i32
    %c0_i32_1 = arith.constant 0 : i32
    return %2, %c0_i32_0 : i32, i32
  }
  func.func @transform_1(%arg0: i32, %arg1: i32) -> (i32, i32) {
    %c0_i32 = arith.constant 0 : i32
    %c0_i32_0 = arith.constant 0 : i32
    %c0_i32_1 = arith.constant 0 : i32
    return %c0_i32, %c0_i32_0 : i32, i32
  }
  func.func @transform_2(%arg0: i32, %arg1: i32) -> (i32, i32) {
    %c0_i32 = arith.constant 0 : i32
    %c0_i32_0 = arith.constant 0 : i32
    return %arg0, %c0_i32 : i32, i32
  }
}

</mosaic_0001>

<llo_original>
// kernel: tpu_custom_call.1
$region0: #{tpu_custom_call.1}
  #allocation0 [shape = 'u32[]', space=smem, size = 0x4, offset = 0x4, fixed_abs, tag = 'smem constant byte address 0x4 - core index']
  #allocation1 [shape = 'u32[72,128]{1,0:T(1,128)}', space=vmem, size = 0x9000, scoped, tag = 'internal scratch']
  #allocation2 [shape = 'f32[8,4]{1,0:T(8,128)}', space=vmem, size = 0x1000, scoped, tag = 'scratch operand']
  %s0 = inlined_call_operand.vmem [shape: f32[8,128], index: 0, kind: input, shape index: {}]
  %s1 = inlined_call_operand.vmem [shape: f32[128,4], index: 1, kind: input, shape index: {}]
  %s2 = inlined_call_operand.hbm [shape: f32[8,128], index: 2, kind: output, shape index: {}]
  %s3 = sld [smem:[#allocation0]]
  $region26: #{tpu_custom_call.1} parent=0
    _
  %s5 = ssub.s32 1, %s3
  %s6 = scalar_select 0, %s5, %s3
  $region1: #{tpu_custom_call.1} parent=0
    #allocation3 [shape = 'u8[4096]{0}', space=vmem, size = 0x1000, scoped, tag = 'output window, operand 0, single buffered']
    #allocation4 [shape = 's32[1]{0}', space=sflag, size = 0x4, scoped, tag = 'scoped memory for tpu_custom_call.1']
    %7 = vsyncpa [#allocation4], 0
    // Predicated region
    $region2: #{tpu_custom_call.1} parent=1 // pred_check
      _
    $region3: #{tpu_custom_call.1} parent=1 // pred_check_branch
      %9 = sbr.rel (0) target = $region5
    $region4: #{tpu_custom_call.1} parent=1 // pred_region
      %s10 = sadd.s32 0, 0
      %p11 = scmp.lt.s32.totalorder %s10, 0
      %s12 = scalar_select %p11, %s10, 0
      %p13 = scmp.lt.s32.totalorder %s12, 0
      %s14 = scalar_select %p13, %s12, 0
      %s15 = smul.addr %s14, 8
      %s16 = scalar_lea.vmem %s0, %s15
      %s17 = sadd.s32 0, 0
      %p18 = scmp.lt.s32.totalorder %s17, 0
      %s19 = scalar_select %p18, %s17, 0
    $region5: #{tpu_custom_call.1} parent=1 // pred_fallthru
      _
    // Predicated region
    $region6: #{tpu_custom_call.1} parent=1 // pred_check
      _
    $region7: #{tpu_custom_call.1} parent=1 // pred_check_branch
      %21 = sbr.rel (0) target = $region9
    $region8: #{tpu_custom_call.1} parent=1 // pred_region
      _
    $region9: #{tpu_custom_call.1} parent=1 // pred_fallthru
      _
    %s22 = sadd.s32 0, 0
    %p23 = scmp.lt.s32.totalorder %s22, 0
    %s24 = scalar_select %p23, %s22, 0
    %p25 = scmp.lt.s32.totalorder %s24, 0
    %s26 = scalar_select %p25, %s24, 0
    %s27 = smul.addr %s26, 8
    %s28 = scalar_lea.vmem %s0, %s27
    %s29 = sadd.s32 0, 0
    %p30 = scmp.lt.s32.totalorder %s29, 0
    %s31 = scalar_select %p30, %s29, 0
    %p32 = scmp.lt.s32.totalorder %s31, 0
    %s33 = scalar_select %p32, %s31, 0
    %s34 = smul.addr %s33, 8
    %s35 = scalar_lea.vmem %s0, %s34
    %s36 = sadd.s32 0, 0
    %p37 = scmp.lt.s32.totalorder %s36, 0
    %s38 = scalar_select %p37, %s36, 0
    %p39 = scmp.eq.s32.totalorder 0, 0
    // Predicated region
    $region10: #{tpu_custom_call.1} parent=1 // pred_check
      %p40 = pneg %p39
    $region11: #{tpu_custom_call.1} parent=1 // pred_check_branch
      %42 = sbr.rel (%p40) target = $region13
    $region12: #{tpu_custom_call.1} parent=1 // pred_region
      %vm43 = vcmask 31744
      %44 = vst.msk [vmem:[#allocation2] sm:$0xff] %vm43, 0.0
    $region13: #{tpu_custom_call.1} parent=1 // pred_fallthru
      _
    %v45 = vld [vmem:[%s35] sm:$0xff]
    %v46 = vlaneseq
    %v47 = vand.u32 %v46, 127
    %vm48 = vcmp.ge.s32.totalorder %v47, 0
    %vm49 = vcmp.lt.s32.totalorder %v47, 32
    %vm50 = vmand %vm48, %vm49
    %v51 = vsel %vm50, %v45, -inf
    %52 = vmax.xlane.f32.xlu0 %v51
    %v53 = vpop.xlane.xlu0 %52
    %v54 = vsel %vm50, %v53, 0.0
    %vm55 = vcmp.ge.s32.totalorder %v47, 32
    %vm56 = vcmp.lt.s32.totalorder %v47, 64
    %vm57 = vmand %vm55, %vm56
    %v58 = vsel %vm57, %v45, -inf
    %59 = vmax.xlane.f32.xlu0 %v58
    %v60 = vpop.xlane.xlu0 %59
    %v61 = vsel %vm57, %v60, %v54
    %vm62 = vcmp.ge.s32.totalorder %v47, 64
    %vm63 = vcmp.lt.s32.totalorder %v47, 96
    %vm64 = vmand %vm62, %vm63
    %v65 = vsel %vm64, %v45, -inf
    %66 = vmax.xlane.f32.xlu0 %v65
    %v67 = vpop.xlane.xlu0 %66
    %v68 = vsel %vm64, %v67, %v61
    %vm69 = vcmp.ge.s32.totalorder %v47, 96
    %vm70 = vcmp.lt.s32.totalorder %v47, 128
    %vm71 = vmand %vm69, %vm70
    %v72 = vsel %vm71, %v45, -inf
    %73 = vmax.xlane.f32.xlu0 %v72
    %v74 = vpop.xlane.xlu0 %73
    %v75 = vsel %vm71, %v74, %v68
    %v76 = vsub.f32 %v45, %v75
    %v77 = vmul.f32 %v76, 1.442695
    %v78 = vpow.pop %v77
    %v79 = vld [vmem:[%s1] sm:$0xff]
    %v80 = vld [vmem:[%s1 + $0x8] sm:$0xff]
    %v81 = vld [vmem:[%s1 + $0x10] sm:$0xff]
    %v82 = vld [vmem:[%s1 + $0x18] sm:$0xff]
    %v83 = vld [vmem:[%s1 + $0x20] sm:$0xff]
    %v84 = vld [vmem:[%s1 + $0x28] sm:$0xff]
    %v85 = vld [vmem:[%s1 + $0x30] sm:$0xff]
    %v86 = vld [vmem:[%s1 + $0x38] sm:$0xff]
    %v87 = vld [vmem:[%s1 + $0x40] sm:$0xff]
    %v88 = vld [vmem:[%s1 + $0x48] sm:$0xff]
    %v89 = vld [vmem:[%s1 + $0x50] sm:$0xff]
    %v90 = vld [vmem:[%s1 + $0x58] sm:$0xff]
    %v91 = vld [vmem:[%s1 + $0x60] sm:$0xff]
    %v92 = vld [vmem:[%s1 + $0x68] sm:$0xff]
    %v93 = vld [vmem:[%s1 + $0x70] sm:$0xff]
    %v94 = vld [vmem:[%s1 + $0x78] sm:$0xff]
    %v95 = vand.u32 %v94, 4294901760
    %96 = vmatpush.msra.mxu0 %v95
    %v97 = vand.u32 %v93, 4294901760
    %98 = vmatpush.msra.mxu0 %v97
    %v99 = vand.u32 %v92, 4294901760
    %100 = vmatpush.msra.mxu0 %v99
    %v101 = vand.u32 %v91, 4294901760
    %102 = vmatpush.msra.mxu0 %v101
    %v103 = vand.u32 %v90, 4294901760
    %104 = vmatpush.msra.mxu0 %v103
    %v105 = vand.u32 %v89, 4294901760
    %106 = vmatpush.msra.mxu0 %v105
    %v107 = vand.u32 %v88, 4294901760
    %108 = vmatpush.msra.mxu0 %v107
    %v109 = vand.u32 %v87, 4294901760
    %110 = vmatpush.msra.mxu0 %v109
    %v111 = vand.u32 %v86, 4294901760
    %112 = vmatpush.msra.mxu0 %v111
    %v113 = vand.u32 %v85, 4294901760
    %114 = vmatpush.msra.mxu0 %v113
    %v115 = vand.u32 %v84, 4294901760
    %116 = vmatpush.msra.mxu0 %v115
    %v117 = vand.u32 %v83, 4294901760
    %118 = vmatpush.msra.mxu0 %v117
    %v119 = vand.u32 %v82, 4294901760
    %120 = vmatpush.msra.mxu0 %v119
    %v121 = vand.u32 %v81, 4294901760
    %122 = vmatpush.msra.mxu0 %v121
    %v123 = vand.u32 %v80, 4294901760
    %124 = vmatpush.msra.mxu0 %v123
    %v125 = vand.u32 %v79, 4294901760
    %126 = vmatpush.msra.mxu0 %v125
    %v127 = vand.u32 %v78, 4294901760
    %v128 = vsub.f32 %v78, %v127
    %v129 = vand.u32 %v128, 4294901760
    %v130 = vsub.f32 %v128, %v129
    %v131 = vand.u32 %v130, 4294901760
    %132 = vmatmul.f32.gmra.mxu0 %v131
    %v133 = vpop.f32.mrf.mxu0
    %v134 = vadd.f32 0.0, %v133
    %135 = vdwg.mxu0
    %v136 = vand.u32 %v94, 4294901760
    %v137 = vsub.f32 %v94, %v136
    %v138 = vand.u32 %v137, 4294901760
    %v139 = vsub.f32 %v137, %v138
    %v140 = vand.u32 %v139, 4294901760
    %141 = vmatpush.msra.mxu0 %v140
    %v142 = vand.u32 %v93, 4294901760
    %v143 = vsub.f32 %v93, %v142
    %v144 = vand.u32 %v143, 4294901760
    %v145 = vsub.f32 %v143, %v144
    %v146 = vand.u32 %v145, 4294901760
    %147 = vmatpush.msra.mxu0 %v146
    %v148 = vand.u32 %v92, 4294901760
    %v149 = vsub.f32 %v92, %v148
    %v150 = vand.u32 %v149, 4294901760
    %v151 = vsub.f32 %v149, %v150
    %v152 = vand.u32 %v151, 4294901760
    %153 = vmatpush.msra.mxu0 %v152
    %v154 = vand.u32 %v91, 4294901760
    %v155 = vsub.f32 %v91, %v154
    %v156 = vand.u32 %v155, 4294901760
    %v157 = vsub.f32 %v155, %v156
    %v158 = vand.u32 %v157, 4294901760
    %159 = vmatpush.msra.mxu0 %v158
    %v160 = vand.u32 %v90, 4294901760
    %v161 = vsub.f32 %v90, %v160
    %v162 = vand.u32 %v161, 4294901760
    %v163 = vsub.f32 %v161, %v162
    %v164 = vand.u32 %v163, 4294901760
    %165 = vmatpush.msra.mxu0 %v164
    %v166 = vand.u32 %v89, 4294901760
    %v167 = vsub.f32 %v89, %v166
    %v168 = vand.u32 %v167, 4294901760
    %v169 = vsub.f32 %v167, %v168
    %v170 = vand.u32 %v169, 4294901760
    %171 = vmatpush.msra.mxu0 %v170
    %v172 = vand.u32 %v88, 4294901760
    %v173 = vsub.f32 %v88, %v172
    %v174 = vand.u32 %v173, 4294901760
    %v175 = vsub.f32 %v173, %v174
    %v176 = vand.u32 %v175, 4294901760
    %177 = vmatpush.msra.mxu0 %v176
    %v178 = vand.u32 %v87, 4294901760
    %v179 = vsub.f32 %v87, %v178
    %v180 = vand.u32 %v179, 4294901760
    %v181 = vsub.f32 %v179, %v180
    %v182 = vand.u32 %v181, 4294901760
    %183 = vmatpush.msra.mxu0 %v182
    %v184 = vand.u32 %v86, 4294901760
    %v185 = vsub.f32 %v86, %v184
    %v186 = vand.u32 %v185, 4294901760
    %v187 = vsub.f32 %v185, %v186
    %v188 = vand.u32 %v187, 4294901760
    %189 = vmatpush.msra.mxu0 %v188
    %v190 = vand.u32 %v85, 4294901760
    %v191 = vsub.f32 %v85, %v190
    %v192 = vand.u32 %v191, 4294901760
    %v193 = vsub.f32 %v191, %v192
    %v194 = vand.u32 %v193, 4294901760
    %195 = vmatpush.msra.mxu0 %v194
    %v196 = vand.u32 %v84, 4294901760
    %v197 = vsub.f32 %v84, %v196
    %v198 = vand.u32 %v197, 4294901760
    %v199 = vsub.f32 %v197, %v198
    %v200 = vand.u32 %v199, 4294901760
    %201 = vmatpush.msra.mxu0 %v200
    %v202 = vand.u32 %v83, 4294901760
    %v203 = vsub.f32 %v83, %v202
    %v204 = vand.u32 %v203, 4294901760
    %v205 = vsub.f32 %v203, %v204
    %v206 = vand.u32 %v205, 4294901760
    %207 = vmatpush.msra.mxu0 %v206
    %v208 = vand.u32 %v82, 4294901760
    %v209 = vsub.f32 %v82, %v208
    %v210 = vand.u32 %v209, 4294901760
    %v211 = vsub.f32 %v209, %v210
    %v212 = vand.u32 %v211, 4294901760
    %213 = vmatpush.msra.mxu0 %v212
    %v214 = vand.u32 %v81, 4294901760
    %v215 = vsub.f32 %v81, %v214
    %v216 = vand.u32 %v215, 4294901760
    %v217 = vsub.f32 %v215, %v216
    %v218 = vand.u32 %v217, 4294901760
    %219 = vmatpush.msra.mxu0 %v218
    %v220 = vand.u32 %v80, 4294901760
    %v221 = vsub.f32 %v80, %v220
    %v222 = vand.u32 %v221, 4294901760
    %v223 = vsub.f32 %v221, %v222
    %v224 = vand.u32 %v223, 4294901760
    %225 = vmatpush.msra.mxu0 %v224
    %v226 = vand.u32 %v79, 4294901760
    %v227 = vsub.f32 %v79, %v226
    %v228 = vand.u32 %v227, 4294901760
    %v229 = vsub.f32 %v227, %v228
    %v230 = vand.u32 %v229, 4294901760
    %231 = vmatpush.msra.mxu0 %v230
    %v232 = vand.u32 %v78, 4294901760
    %233 = vmatmul.f32.gmra.mxu0 %v232
    %v234 = vpop.f32.mrf.mxu0
    %v235 = vadd.f32 %v134, %v234
    %236 = vdwg.mxu0
    %v237 = vand.u32 %v94, 4294901760
    %v238 = vsub.f32 %v94, %v237
    %239 = vmatpush.msra.mxu0 %v238
    %v240 = vand.u32 %v93, 4294901760
    %v241 = vsub.f32 %v93, %v240
    %242 = vmatpush.msra.mxu0 %v241
    %v243 = vand.u32 %v92, 4294901760
    %v244 = vsub.f32 %v92, %v243
    %245 = vmatpush.msra.mxu0 %v244
    %v246 = vand.u32 %v91, 4294901760
    %v247 = vsub.f32 %v91, %v246
    %248 = vmatpush.msra.mxu0 %v247
    %v249 = vand.u32 %v90, 4294901760
    %v250 = vsub.f32 %v90, %v249
    %251 = vmatpush.msra.mxu0 %v250
    %v252 = vand.u32 %v89, 4294901760
    %v253 = vsub.f32 %v89, %v252
    %254 = vmatpush.msra.mxu0 %v253
    %v255 = vand.u32 %v88, 4294901760
    %v256 = vsub.f32 %v88, %v255
    %257 = vmatpush.msra.mxu0 %v256
    %v258 = vand.u32 %v87, 4294901760
    %v259 = vsub.f32 %v87, %v258
    %260 = vmatpush.msra.mxu0 %v259
    %v261 = vand.u32 %v86, 4294901760
    %v262 = vsub.f32 %v86, %v261
    %263 = vmatpush.msra.mxu0 %v262
    %v264 = vand.u32 %v85, 4294901760
    %v265 = vsub.f32 %v85, %v264
    %266 = vmatpush.msra.mxu0 %v265
    %v267 = vand.u32 %v84, 4294901760
    %v268 = vsub.f32 %v84, %v267
    %269 = vmatpush.msra.mxu0 %v268
    %v270 = vand.u32 %v83, 4294901760
    %v271 = vsub.f32 %v83, %v270
    %272 = vmatpush.msra.mxu0 %v271
    %v273 = vand.u32 %v82, 4294901760
    %v274 = vsub.f32 %v82, %v273
    %275 = vmatpush.msra.mxu0 %v274
    %v276 = vand.u32 %v81, 4294901760
    %v277 = vsub.f32 %v81, %v276
    %278 = vmatpush.msra.mxu0 %v277
    %v279 = vand.u32 %v80, 4294901760
    %v280 = vsub.f32 %v80, %v279
    %281 = vmatpush.msra.mxu0 %v280
    %v282 = vand.u32 %v79, 4294901760
    %v283 = vsub.f32 %v79, %v282
    %284 = vmatpush.msra.mxu0 %v283
    %v285 = vand.u32 %v78, 4294901760
    %v286 = vsub.f32 %v78, %v285
    %287 = vmatmul.f32.gmra.mxu0 %v286
    %v288 = vpop.f32.mrf.mxu0
    %v289 = vadd.f32 %v235, %v288
    %290 = vdwg.mxu0
    %v291 = vand.u32 %v94, 4294901760
    %292 = vmatpush.msra.mxu0 %v291
    %v293 = vand.u32 %v93, 4294901760
    %294 = vmatpush.msra.mxu0 %v293
    %v295 = vand.u32 %v92, 4294901760
    %296 = vmatpush.msra.mxu0 %v295
    %v297 = vand.u32 %v91, 4294901760
    %298 = vmatpush.msra.mxu0 %v297
    %v299 = vand.u32 %v90, 4294901760
    %300 = vmatpush.msra.mxu0 %v299
    %v301 = vand.u32 %v89, 4294901760
    %302 = vmatpush.msra.mxu0 %v301
    %v303 = vand.u32 %v88, 4294901760
    %304 = vmatpush.msra.mxu0 %v303
    %v305 = vand.u32 %v87, 4294901760
    %306 = vmatpush.msra.mxu0 %v305
    %v307 = vand.u32 %v86, 4294901760
    %308 = vmatpush.msra.mxu0 %v307
    %v309 = vand.u32 %v85, 4294901760
    %310 = vmatpush.msra.mxu0 %v309
    %v311 = vand.u32 %v84, 4294901760
    %312 = vmatpush.msra.mxu0 %v311
    %v313 = vand.u32 %v83, 4294901760
    %314 = vmatpush.msra.mxu0 %v313
    %v315 = vand.u32 %v82, 4294901760
    %316 = vmatpush.msra.mxu0 %v315
    %v317 = vand.u32 %v81, 4294901760
    %318 = vmatpush.msra.mxu0 %v317
    %v319 = vand.u32 %v80, 4294901760
    %320 = vmatpush.msra.mxu0 %v319
    %v321 = vand.u32 %v79, 4294901760
    %322 = vmatpush.msra.mxu0 %v321
    %v323 = vand.u32 %v78, 4294901760
    %v324 = vsub.f32 %v78, %v323
    %v325 = vand.u32 %v324, 4294901760
    %326 = vmatmul.f32.gmra.mxu0 %v325
    %v327 = vpop.f32.mrf.mxu0
    %v328 = vadd.f32 %v289, %v327
    %329 = vdwg.mxu0
    %v330 = vand.u32 %v94, 4294901760
    %v331 = vsub.f32 %v94, %v330
    %v332 = vand.u32 %v331, 4294901760
    %333 = vmatpush.msra.mxu0 %v332
    %v334 = vand.u32 %v93, 4294901760
    %v335 = vsub.f32 %v93, %v334
    %v336 = vand.u32 %v335, 4294901760
    %337 = vmatpush.msra.mxu0 %v336
    %v338 = vand.u32 %v92, 4294901760
    %v339 = vsub.f32 %v92, %v338
    %v340 = vand.u32 %v339, 4294901760
    %341 = vmatpush.msra.mxu0 %v340
    %v342 = vand.u32 %v91, 4294901760
    %v343 = vsub.f32 %v91, %v342
    %v344 = vand.u32 %v343, 4294901760
    %345 = vmatpush.msra.mxu0 %v344
    %v346 = vand.u32 %v90, 4294901760
    %v347 = vsub.f32 %v90, %v346
    %v348 = vand.u32 %v347, 4294901760
    %349 = vmatpush.msra.mxu0 %v348
    %v350 = vand.u32 %v89, 4294901760
    %v351 = vsub.f32 %v89, %v350
    %v352 = vand.u32 %v351, 4294901760
    %353 = vmatpush.msra.mxu0 %v352
    %v354 = vand.u32 %v88, 4294901760
    %v355 = vsub.f32 %v88, %v354
    %v356 = vand.u32 %v355, 4294901760
    %357 = vmatpush.msra.mxu0 %v356
    %v358 = vand.u32 %v87, 4294901760
    %v359 = vsub.f32 %v87, %v358
    %v360 = vand.u32 %v359, 4294901760
    %361 = vmatpush.msra.mxu0 %v360
    %v362 = vand.u32 %v86, 4294901760
    %v363 = vsub.f32 %v86, %v362
    %v364 = vand.u32 %v363, 4294901760
    %365 = vmatpush.msra.mxu0 %v364
    %v366 = vand.u32 %v85, 4294901760
    %v367 = vsub.f32 %v85, %v366
    %v368 = vand.u32 %v367, 4294901760
    %369 = vmatpush.msra.mxu0 %v368
    %v370 = vand.u32 %v84, 4294901760
    %v371 = vsub.f32 %v84, %v370
    %v372 = vand.u32 %v371, 4294901760
    %373 = vmatpush.msra.mxu0 %v372
    %v374 = vand.u32 %v83, 4294901760
    %v375 = vsub.f32 %v83, %v374
    %v376 = vand.u32 %v375, 4294901760
    %377 = vmatpush.msra.mxu0 %v376
    %v378 = vand.u32 %v82, 4294901760
    %v379 = vsub.f32 %v82, %v378
    %v380 = vand.u32 %v379, 4294901760
    %381 = vmatpush.msra.mxu0 %v380
    %v382 = vand.u32 %v81, 4294901760
    %v383 = vsub.f32 %v81, %v382
    %v384 = vand.u32 %v383, 4294901760
    %385 = vmatpush.msra.mxu0 %v384
    %v386 = vand.u32 %v80, 4294901760
    %v387 = vsub.f32 %v80, %v386
    %v388 = vand.u32 %v387, 4294901760
    %389 = vmatpush.msra.mxu0 %v388
    %v390 = vand.u32 %v79, 4294901760
    %v391 = vsub.f32 %v79, %v390
    %v392 = vand.u32 %v391, 4294901760
    %393 = vmatpush.msra.mxu0 %v392
    %v394 = vand.u32 %v78, 4294901760
    %395 = vmatmul.f32.gmra.mxu0 %v394
    %v396 = vpop.f32.mrf.mxu0
    %v397 = vadd.f32 %v328, %v396
    %398 = vdwg.mxu0
    %v399 = vand.u32 %v94, 4294901760
    %400 = vmatpush.msra.mxu0 %v399
    %v401 = vand.u32 %v93, 4294901760
    %402 = vmatpush.msra.mxu0 %v401
    %v403 = vand.u32 %v92, 4294901760
    %404 = vmatpush.msra.mxu0 %v403
    %v405 = vand.u32 %v91, 4294901760
    %406 = vmatpush.msra.mxu0 %v405
    %v407 = vand.u32 %v90, 4294901760
    %408 = vmatpush.msra.mxu0 %v407
    %v409 = vand.u32 %v89, 4294901760
    %410 = vmatpush.msra.mxu0 %v409
    %v411 = vand.u32 %v88, 4294901760
    %412 = vmatpush.msra.mxu0 %v411
    %v413 = vand.u32 %v87, 4294901760
    %414 = vmatpush.msra.mxu0 %v413
    %v415 = vand.u32 %v86, 4294901760
    %416 = vmatpush.msra.mxu0 %v415
    %v417 = vand.u32 %v85, 4294901760
    %418 = vmatpush.msra.mxu0 %v417
    %v419 = vand.u32 %v84, 4294901760
    %420 = vmatpush.msra.mxu0 %v419
    %v421 = vand.u32 %v83, 4294901760
    %422 = vmatpush.msra.mxu0 %v421
    %v423 = vand.u32 %v82, 4294901760
    %424 = vmatpush.msra.mxu0 %v423
    %v425 = vand.u32 %v81, 4294901760
    %426 = vmatpush.msra.mxu0 %v425
    %v427 = vand.u32 %v80, 4294901760
    %428 = vmatpush.msra.mxu0 %v427
    %v429 = vand.u32 %v79, 4294901760
    %430 = vmatpush.msra.mxu0 %v429
    %v431 = vand.u32 %v78, 4294901760
    %432 = vmatmul.f32.gmra.mxu0 %v431
    %v433 = vpop.f32.mrf.mxu0
    %v434 = vadd.f32 %v397, %v433
    %435 = vdwg.mxu0
    %v436 = vmul.f32 %v78, %v76
    %v437 = vand.u32 %v94, 4294901760
    %438 = vmatpush.msra.mxu0 %v437
    %v439 = vand.u32 %v93, 4294901760
    %440 = vmatpush.msra.mxu0 %v439
    %v441 = vand.u32 %v92, 4294901760
    %442 = vmatpush.msra.mxu0 %v441
    %v443 = vand.u32 %v91, 4294901760
    %444 = vmatpush.msra.mxu0 %v443
    %v445 = vand.u32 %v90, 4294901760
    %446 = vmatpush.msra.mxu0 %v445
    %v447 = vand.u32 %v89, 4294901760
    %448 = vmatpush.msra.mxu0 %v447
    %v449 = vand.u32 %v88, 4294901760
    %450 = vmatpush.msra.mxu0 %v449
    %v451 = vand.u32 %v87, 4294901760
    %452 = vmatpush.msra.mxu0 %v451
    %v453 = vand.u32 %v86, 4294901760
    %454 = vmatpush.msra.mxu0 %v453
    %v455 = vand.u32 %v85, 4294901760
    %456 = vmatpush.msra.mxu0 %v455
    %v457 = vand.u32 %v84, 4294901760
    %458 = vmatpush.msra.mxu0 %v457
    %v459 = vand.u32 %v83, 4294901760
    %460 = vmatpush.msra.mxu0 %v459
    %v461 = vand.u32 %v82, 4294901760
    %462 = vmatpush.msra.mxu0 %v461
    %v463 = vand.u32 %v81, 4294901760
    %464 = vmatpush.msra.mxu0 %v463
    %v465 = vand.u32 %v80, 4294901760
    %466 = vmatpush.msra.mxu0 %v465
    %v467 = vand.u32 %v79, 4294901760
    %468 = vmatpush.msra.mxu0 %v467
    %v469 = vand.u32 %v436, 4294901760
    %v470 = vsub.f32 %v436, %v469
    %v471 = vand.u32 %v470, 4294901760
    %v472 = vsub.f32 %v470, %v471
    %v473 = vand.u32 %v472, 4294901760
    %474 = vmatmul.f32.gmra.mxu0 %v473
    %v475 = vpop.f32.mrf.mxu0
    %v476 = vadd.f32 0.0, %v475
    %477 = vdwg.mxu0
    %v478 = vand.u32 %v94, 4294901760
    %v479 = vsub.f32 %v94, %v478
    %v480 = vand.u32 %v479, 4294901760
    %v481 = vsub.f32 %v479, %v480
    %v482 = vand.u32 %v481, 4294901760
    %483 = vmatpush.msra.mxu0 %v482
    %v484 = vand.u32 %v93, 4294901760
    %v485 = vsub.f32 %v93, %v484
    %v486 = vand.u32 %v485, 4294901760
    %v487 = vsub.f32 %v485, %v486
    %v488 = vand.u32 %v487, 4294901760
    %489 = vmatpush.msra.mxu0 %v488
    %v490 = vand.u32 %v92, 4294901760
    %v491 = vsub.f32 %v92, %v490
    %v492 = vand.u32 %v491, 4294901760
    %v493 = vsub.f32 %v491, %v492
    %v494 = vand.u32 %v493, 4294901760
    %495 = vmatpush.msra.mxu0 %v494
    %v496 = vand.u32 %v91, 4294901760
    %v497 = vsub.f32 %v91, %v496
    %v498 = vand.u32 %v497, 4294901760
    %v499 = vsub.f32 %v497, %v498
    %v500 = vand.u32 %v499, 4294901760
    %501 = vmatpush.msra.mxu0 %v500
    %v502 = vand.u32 %v90, 4294901760
    %v503 = vsub.f32 %v90, %v502
    %v504 = vand.u32 %v503, 4294901760
    %v505 = vsub.f32 %v503, %v504
    %v506 = vand.u32 %v505, 4294901760
    %507 = vmatpush.msra.mxu0 %v506
    %v508 = vand.u32 %v89, 4294901760
    %v509 = vsub.f32 %v89, %v508
    %v510 = vand.u32 %v509, 4294901760
    %v511 = vsub.f32 %v509, %v510
    %v512 = vand.u32 %v511, 4294901760
    %513 = vmatpush.msra.mxu0 %v512
    %v514 = vand.u32 %v88, 4294901760
    %v515 = vsub.f32 %v88, %v514
    %v516 = vand.u32 %v515, 4294901760
    %v517 = vsub.f32 %v515, %v516
    %v518 = vand.u32 %v517, 4294901760
    %519 = vmatpush.msra.mxu0 %v518
    %v520 = vand.u32 %v87, 4294901760
    %v521 = vsub.f32 %v87, %v520
    %v522 = vand.u32 %v521, 4294901760
    %v523 = vsub.f32 %v521, %v522
    %v524 = vand.u32 %v523, 4294901760
    %525 = vmatpush.msra.mxu0 %v524
    %v526 = vand.u32 %v86, 4294901760
    %v527 = vsub.f32 %v86, %v526
    %v528 = vand.u32 %v527, 4294901760
    %v529 = vsub.f32 %v527, %v528
    %v530 = vand.u32 %v529, 4294901760
    %531 = vmatpush.msra.mxu0 %v530
    %v532 = vand.u32 %v85, 4294901760
    %v533 = vsub.f32 %v85, %v532
    %v534 = vand.u32 %v533, 4294901760
    %v535 = vsub.f32 %v533, %v534
    %v536 = vand.u32 %v535, 4294901760
    %537 = vmatpush.msra.mxu0 %v536
    %v538 = vand.u32 %v84, 4294901760
    %v539 = vsub.f32 %v84, %v538
    %v540 = vand.u32 %v539, 4294901760
    %v541 = vsub.f32 %v539, %v540
    %v542 = vand.u32 %v541, 4294901760
    %543 = vmatpush.msra.mxu0 %v542
    %v544 = vand.u32 %v83, 4294901760
    %v545 = vsub.f32 %v83, %v544
    %v546 = vand.u32 %v545, 4294901760
    %v547 = vsub.f32 %v545, %v546
    %v548 = vand.u32 %v547, 4294901760
    %549 = vmatpush.msra.mxu0 %v548
    %v550 = vand.u32 %v82, 4294901760
    %v551 = vsub.f32 %v82, %v550
    %v552 = vand.u32 %v551, 4294901760
    %v553 = vsub.f32 %v551, %v552
    %v554 = vand.u32 %v553, 4294901760
    %555 = vmatpush.msra.mxu0 %v554
    %v556 = vand.u32 %v81, 4294901760
    %v557 = vsub.f32 %v81, %v556
    %v558 = vand.u32 %v557, 4294901760
    %v559 = vsub.f32 %v557, %v558
    %v560 = vand.u32 %v559, 4294901760
    %561 = vmatpush.msra.mxu0 %v560
    %v562 = vand.u32 %v80, 4294901760
    %v563 = vsub.f32 %v80, %v562
    %v564 = vand.u32 %v563, 4294901760
    %v565 = vsub.f32 %v563, %v564
    %v566 = vand.u32 %v565, 4294901760
    %567 = vmatpush.msra.mxu0 %v566
    %v568 = vand.u32 %v79, 4294901760
    %v569 = vsub.f32 %v79, %v568
    %v570 = vand.u32 %v569, 4294901760
    %v571 = vsub.f32 %v569, %v570
    %v572 = vand.u32 %v571, 4294901760
    %573 = vmatpush.msra.mxu0 %v572
    %v574 = vand.u32 %v436, 4294901760
    %575 = vmatmul.f32.gmra.mxu0 %v574
    %v576 = vpop.f32.mrf.mxu0
    %v577 = vadd.f32 %v476, %v576
    %578 = vdwg.mxu0
    %v579 = vand.u32 %v94, 4294901760
    %v580 = vsub.f32 %v94, %v579
    %581 = vmatpush.msra.mxu0 %v580
    %v582 = vand.u32 %v93, 4294901760
    %v583 = vsub.f32 %v93, %v582
    %584 = vmatpush.msra.mxu0 %v583
    %v585 = vand.u32 %v92, 4294901760
    %v586 = vsub.f32 %v92, %v585
    %587 = vmatpush.msra.mxu0 %v586
    %v588 = vand.u32 %v91, 4294901760
    %v589 = vsub.f32 %v91, %v588
    %590 = vmatpush.msra.mxu0 %v589
    %v591 = vand.u32 %v90, 4294901760
    %v592 = vsub.f32 %v90, %v591
    %593 = vmatpush.msra.mxu0 %v592
    %v594 = vand.u32 %v89, 4294901760
    %v595 = vsub.f32 %v89, %v594
    %596 = vmatpush.msra.mxu0 %v595
    %v597 = vand.u32 %v88, 4294901760
    %v598 = vsub.f32 %v88, %v597
    %599 = vmatpush.msra.mxu0 %v598
    %v600 = vand.u32 %v87, 4294901760
    %v601 = vsub.f32 %v87, %v600
    %602 = vmatpush.msra.mxu0 %v601
    %v603 = vand.u32 %v86, 4294901760
    %v604 = vsub.f32 %v86, %v603
    %605 = vmatpush.msra.mxu0 %v604
    %v606 = vand.u32 %v85, 4294901760
    %v607 = vsub.f32 %v85, %v606
    %608 = vmatpush.msra.mxu0 %v607
    %v609 = vand.u32 %v84, 4294901760
    %v610 = vsub.f32 %v84, %v609
    %611 = vmatpush.msra.mxu0 %v610
    %v612 = vand.u32 %v83, 4294901760
    %v613 = vsub.f32 %v83, %v612
    %614 = vmatpush.msra.mxu0 %v613
    %v615 = vand.u32 %v82, 4294901760
    %v616 = vsub.f32 %v82, %v615
    %617 = vmatpush.msra.mxu0 %v616
    %v618 = vand.u32 %v81, 4294901760
    %v619 = vsub.f32 %v81, %v618
    %620 = vmatpush.msra.mxu0 %v619
    %v621 = vand.u32 %v80, 4294901760
    %v622 = vsub.f32 %v80, %v621
    %623 = vmatpush.msra.mxu0 %v622
    %v624 = vand.u32 %v79, 4294901760
    %v625 = vsub.f32 %v79, %v624
    %626 = vmatpush.msra.mxu0 %v625
    %v627 = vand.u32 %v436, 4294901760
    %v628 = vsub.f32 %v436, %v627
    %629 = vmatmul.f32.gmra.mxu0 %v628
    %v630 = vpop.f32.mrf.mxu0
    %v631 = vadd.f32 %v577, %v630
    %632 = vdwg.mxu0
    %v633 = vand.u32 %v94, 4294901760
    %634 = vmatpush.msra.mxu0 %v633
    %v635 = vand.u32 %v93, 4294901760
    %636 = vmatpush.msra.mxu0 %v635
    %v637 = vand.u32 %v92, 4294901760
    %638 = vmatpush.msra.mxu0 %v637
    %v639 = vand.u32 %v91, 4294901760
    %640 = vmatpush.msra.mxu0 %v639
    %v641 = vand.u32 %v90, 4294901760
    %642 = vmatpush.msra.mxu0 %v641
    %v643 = vand.u32 %v89, 4294901760
    %644 = vmatpush.msra.mxu0 %v643
    %v645 = vand.u32 %v88, 4294901760
    %646 = vmatpush.msra.mxu0 %v645
    %v647 = vand.u32 %v87, 4294901760
    %648 = vmatpush.msra.mxu0 %v647
    %v649 = vand.u32 %v86, 4294901760
    %650 = vmatpush.msra.mxu0 %v649
    %v651 = vand.u32 %v85, 4294901760
    %652 = vmatpush.msra.mxu0 %v651
    %v653 = vand.u32 %v84, 4294901760
    %654 = vmatpush.msra.mxu0 %v653
    %v655 = vand.u32 %v83, 4294901760
    %656 = vmatpush.msra.mxu0 %v655
    %v657 = vand.u32 %v82, 4294901760
    %658 = vmatpush.msra.mxu0 %v657
    %v659 = vand.u32 %v81, 4294901760
    %660 = vmatpush.msra.mxu0 %v659
    %v661 = vand.u32 %v80, 4294901760
    %662 = vmatpush.msra.mxu0 %v661
    %v663 = vand.u32 %v79, 4294901760
    %664 = vmatpush.msra.mxu0 %v663
    %v665 = vand.u32 %v436, 4294901760
    %v666 = vsub.f32 %v436, %v665
    %v667 = vand.u32 %v666, 4294901760
    %668 = vmatmul.f32.gmra.mxu0 %v667
    %v669 = vpop.f32.mrf.mxu0
    %v670 = vadd.f32 %v631, %v669
    %671 = vdwg.mxu0
    %v672 = vand.u32 %v94, 4294901760
    %v673 = vsub.f32 %v94, %v672
    %v674 = vand.u32 %v673, 4294901760
    %675 = vmatpush.msra.mxu0 %v674
    %v676 = vand.u32 %v93, 4294901760
    %v677 = vsub.f32 %v93, %v676
    %v678 = vand.u32 %v677, 4294901760
    %679 = vmatpush.msra.mxu0 %v678
    %v680 = vand.u32 %v92, 4294901760
    %v681 = vsub.f32 %v92, %v680
    %v682 = vand.u32 %v681, 4294901760
    %683 = vmatpush.msra.mxu0 %v682
    %v684 = vand.u32 %v91, 4294901760
    %v685 = vsub.f32 %v91, %v684
    %v686 = vand.u32 %v685, 4294901760
    %687 = vmatpush.msra.mxu0 %v686
    %v688 = vand.u32 %v90, 4294901760
    %v689 = vsub.f32 %v90, %v688
    %v690 = vand.u32 %v689, 4294901760
    %691 = vmatpush.msra.mxu0 %v690
    %v692 = vand.u32 %v89, 4294901760
    %v693 = vsub.f32 %v89, %v692
    %v694 = vand.u32 %v693, 4294901760
    %695 = vmatpush.msra.mxu0 %v694
    %v696 = vand.u32 %v88, 4294901760
    %v697 = vsub.f32 %v88, %v696
    %v698 = vand.u32 %v697, 4294901760
    %699 = vmatpush.msra.mxu0 %v698
    %v700 = vand.u32 %v87, 4294901760
    %v701 = vsub.f32 %v87, %v700
    %v702 = vand.u32 %v701, 4294901760
    %703 = vmatpush.msra.mxu0 %v702
    %v704 = vand.u32 %v86, 4294901760
    %v705 = vsub.f32 %v86, %v704
    %v706 = vand.u32 %v705, 4294901760
    %707 = vmatpush.msra.mxu0 %v706
    %v708 = vand.u32 %v85, 4294901760
    %v709 = vsub.f32 %v85, %v708
    %v710 = vand.u32 %v709, 4294901760
    %711 = vmatpush.msra.mxu0 %v710
    %v712 = vand.u32 %v84, 4294901760
    %v713 = vsub.f32 %v84, %v712
    %v714 = vand.u32 %v713, 4294901760
    %715 = vmatpush.msra.mxu0 %v714
    %v716 = vand.u32 %v83, 4294901760
    %v717 = vsub.f32 %v83, %v716
    %v718 = vand.u32 %v717, 4294901760
    %719 = vmatpush.msra.mxu0 %v718
    %v720 = vand.u32 %v82, 4294901760
    %v721 = vsub.f32 %v82, %v720
    %v722 = vand.u32 %v721, 4294901760
    %723 = vmatpush.msra.mxu0 %v722
    %v724 = vand.u32 %v81, 4294901760
    %v725 = vsub.f32 %v81, %v724
    %v726 = vand.u32 %v725, 4294901760
    %727 = vmatpush.msra.mxu0 %v726
    %v728 = vand.u32 %v80, 4294901760
    %v729 = vsub.f32 %v80, %v728
    %v730 = vand.u32 %v729, 4294901760
    %731 = vmatpush.msra.mxu0 %v730
    %v732 = vand.u32 %v79, 4294901760
    %v733 = vsub.f32 %v79, %v732
    %v734 = vand.u32 %v733, 4294901760
    %735 = vmatpush.msra.mxu0 %v734
    %v736 = vand.u32 %v436, 4294901760
    %737 = vmatmul.f32.gmra.mxu0 %v736
    %v738 = vpop.f32.mrf.mxu0
    %v739 = vadd.f32 %v670, %v738
    %740 = vdwg.mxu0
    %v741 = vand.u32 %v94, 4294901760
    %742 = vmatpush.msra.mxu0 %v741
    %v743 = vand.u32 %v93, 4294901760
    %744 = vmatpush.msra.mxu0 %v743
    %v745 = vand.u32 %v92, 4294901760
    %746 = vmatpush.msra.mxu0 %v745
    %v747 = vand.u32 %v91, 4294901760
    %748 = vmatpush.msra.mxu0 %v747
    %v749 = vand.u32 %v90, 4294901760
    %750 = vmatpush.msra.mxu0 %v749
    %v751 = vand.u32 %v89, 4294901760
    %752 = vmatpush.msra.mxu0 %v751
    %v753 = vand.u32 %v88, 4294901760
    %754 = vmatpush.msra.mxu0 %v753
    %v755 = vand.u32 %v87, 4294901760
    %756 = vmatpush.msra.mxu0 %v755
    %v757 = vand.u32 %v86, 4294901760
    %758 = vmatpush.msra.mxu0 %v757
    %v759 = vand.u32 %v85, 4294901760
    %760 = vmatpush.msra.mxu0 %v759
    %v761 = vand.u32 %v84, 4294901760
    %762 = vmatpush.msra.mxu0 %v761
    %v763 = vand.u32 %v83, 4294901760
    %764 = vmatpush.msra.mxu0 %v763
    %v765 = vand.u32 %v82, 4294901760
    %766 = vmatpush.msra.mxu0 %v765
    %v767 = vand.u32 %v81, 4294901760
    %768 = vmatpush.msra.mxu0 %v767
    %v769 = vand.u32 %v80, 4294901760
    %770 = vmatpush.msra.mxu0 %v769
    %v771 = vand.u32 %v79, 4294901760
    %772 = vmatpush.msra.mxu0 %v771
    %v773 = vand.u32 %v436, 4294901760
    %774 = vmatmul.f32.gmra.mxu0 %v773
    %v775 = vpop.f32.mrf.mxu0
    %v776 = vadd.f32 %v739, %v775
    %777 = vdwg.mxu0
    %v778 = vlog2.pop %v434
    %v779 = vmul.f32 %v778, 0.6931472
    %v780 = vrcp.pop %v434
    %v781 = vmul.f32 %v434, %v780
    %v782 = vsub.f32 1.0, %v781
    %v783 = vmul.f32 %v780, %v782
    %v784 = vadd.f32 %v780, %v783
    %vm785 = vweird.f32 %v434
    %vm786 = vweird.f32 %v780
    %vm787 = vmor %vm785, %vm786
    %v788 = vsel %vm787, %v780, %v784
    %v789 = vand.u32 2147483647, %v434
    %vm790 = vcmp.eq.f32.partialorder %v789, 8.507059e+37
    %v791 = vand.u32 %v434, 2147483648
    %v792 = vor.u32 1.1754944e-38, %v791
    %v793 = vsel %vm790, %v792, %v788
    %v794 = vmul.f32 %v776, %v793
    %v795 = vsub.f32 %v779, %v794
    %s796 = sadd.s32 0, 0
    %s797 = smul.u32 %s796, 8
    %v798 = vlaneseq
    %v799 = vshrl.u32 %v798, 7
    %v800 = vstv %s797
    %v801 = vadd.s32 %v800, %v799
    %vm802 = vcmp.lt.s32.totalorder %v801, 2
    %v803 = vsel %vm802, %v795, 0.0
    %v804 = vld [vmem:[#allocation2] sm:$0xff]
    %v805 = vadd.f32 %v803, 0.0
    %v806 = vadd.f32 %v804, %v805
    %vm807 = vcmask 31744
    %808 = vst.msk [vmem:[#allocation2] sm:$0xff] %vm807, %v806
    // Predicated region
    $region14: #{tpu_custom_call.1} parent=1 // pred_check
      %p809 = pneg %p39
    $region15: #{tpu_custom_call.1} parent=1 // pred_check_branch
      %811 = sbr.rel (%p809) target = $region17
    $region16: #{tpu_custom_call.1} parent=1 // pred_region
      %v812 = vld [vmem:[#allocation2] sm:$0xff]
      %v813 = vsel %vm807, %v812, 0.0
      %814 = vadd.xlane.f32.xlu0 %v813
      %v815 = vpop.xlane.xlu0 %814
      %v816 = vrot.slane %v815, 4
      %v817 = vadd.f32 %v815, %v816
      %v818 = vrot.slane %v817, 2
      %v819 = vadd.f32 %v817, %v818
      %v820 = vrot.slane %v819, 1
      %v821 = vadd.f32 %v819, %v820
      %s822 = vtos %v821
      %s823 = smul.f32 %s822, 0.125
      %v824 = vstv %s823
      %825 = vst [vmem:[#allocation3] sm:$0xff] %v824
    $region17: #{tpu_custom_call.1} parent=1 // pred_fallthru
      _
    // Predicated region
    $region18: #{tpu_custom_call.1} parent=1 // pred_check
      _
    $region19: #{tpu_custom_call.1} parent=1 // pred_check_branch
      %827 = sbr.rel (0) target = $region21
    $region20: #{tpu_custom_call.1} parent=1 // pred_region
      %829 = vsyncadd [#allocation4], 0
      %s831 = sshll.u32 [#allocation3], 4
      %s832 = int_to_ptr.vmem [resolvable:$true] %s831
      %s833 = sshll.u32 %s2, 4
      %s834 = int_to_ptr.hbm [resolvable:$true] %s833
      %836 = dma.vmem_to_hbm [thread:$0]  %s832, 128, %s834, [#allocation4]
    $region21: #{tpu_custom_call.1} parent=1 // pred_fallthru
      _
    // Predicated region
    $region22: #{tpu_custom_call.1} parent=1 // pred_check
      _
    $region23: #{tpu_custom_call.1} parent=1 // pred_check_branch
      %838 = sbr.rel (0) target = $region25
    $region24: #{tpu_custom_call.1} parent=1 // pred_region
      %840 = dma.done [#allocation4], 128
    $region25: #{tpu_custom_call.1} parent=1 // pred_fallthru
      _
    %841 = vsyncpa [#allocation4], 1

</llo_original>
